<compile_context>
chip_gen: v7x
topology: tpu7x:2x2x1
jax: 0.10.0
libtpu: 0.0.40
codegen_flags: <defaults>
</compile_context>

<pallas_src>
import functools

import numpy as np
import jax
import jax.numpy as jnp
from jax import lax
from jax.experimental import pallas as pl
from jax.experimental.pallas import tpu as pltpu


# -------------------------------- Pallas kernel ------------------------------
def _focal_loss_kernel(xT_ref, tgt_ref, out_ref, *, alpha, gamma):
    # xT_ref : (C, BLOCK_N) logits block, class-major (samples on the lane axis)
    # tgt_ref: (1, BLOCK_N) int32 class indices
    # out_ref: (1, BLOCK_N) f32 per-sample focal loss
    z = xT_ref[...].astype(jnp.float32)                        # in-kernel cast (VPU)
    tgt = tgt_ref[...]                                         # (1, BN) int32

    # Numerically stable log-sum-exp over the class (sublane) axis.
    m = jnp.max(z, axis=0, keepdims=True)                      # (1, BN)
    e = jnp.exp(z - m)                                         # (C, BN)  EUP
    s = jnp.sum(e, axis=0, keepdims=True)                      # (1, BN)  s >= 1

    # Gather z[y] with a single masked sublane reduction (no dynamic gather).
    cls = lax.broadcasted_iota(jnp.int32, z.shape, 0)          # (C, BN)
    z_y = jnp.sum(jnp.where(cls == tgt, z, 0.0), axis=0, keepdims=True)

    ce = (m - z_y) + jnp.log(s)                                # per-sample CE (>= 0)
    pt = jnp.exp(-ce)                                          # prob. of true class
    one_minus_pt = jnp.maximum(1.0 - pt, 0.0)

    g = float(gamma)
    if g == int(g) and 0 <= int(g) <= 4:                       # small integer gamma:
        w = jnp.ones_like(one_minus_pt)                        # plain VPU multiplies,
        for _ in range(int(g)):                                # no pow()
            w = w * one_minus_pt
    else:
        w = jnp.power(one_minus_pt, g)

    out_ref[...] = (float(alpha) * w) * ce                     # lane-dense store


# --------------------------------- wrapper -----------------------------------
def focal_loss(logits, targets, *, alpha=1.0, gamma=2.0, reduction="mean",
               block_n=None):
    """logits: (N, C) any float dtype; targets: (N,) integer class ids."""
    n, c = logits.shape
    itemsize = jnp.dtype(logits.dtype).itemsize

    if block_n is None:
        # Keep one double-buffered logits tile (plus the in-kernel f32 temps)
        # well inside the scoped-VMEM budget on every generation
        # (v5e 16 MiB .. v7x 64 MiB physical).
        budget = 2 * 1024 * 1024                               # bytes per x tile
        block_n = max(128, min(4096, budget // max(c * itemsize, 1)))
        block_n = (block_n // 128) * 128
    # Never use a block wider than N rounded up to the lane width.
    block_n = min(block_n, max(128, pl.cdiv(n, 128) * 128))
    assert block_n % 128 == 0, "block_n must be a multiple of 128 (lane width)"

    grid = (pl.cdiv(n, block_n),)                              # ragged tail handled
                                                               # by Pallas masking

    # Class-major layout: sample axis -> 128-lane dimension.  Pure layout
    # plumbing; logits keep their native dtype (no wrapper upcast, no pad pass).
    xT = jnp.transpose(logits)                                 # (C, N)
    tgt = targets.astype(jnp.int32).reshape(1, n)              # lane-dense targets

    kernel = functools.partial(_focal_loss_kernel,
                               alpha=float(alpha), gamma=float(gamma))

    # VMEM: double-buffered input tiles + in-kernel f32 temporaries + headroom.
    x_bytes = c * block_n * itemsize
    f32_bytes = c * block_n * 4
    small_bytes = 8 * block_n * 4                              # (1, BN) pads to 8 sublanes
    vmem_limit = int(min(32 << 20,
                         max(4 << 20,
                             4 * x_bytes + 6 * f32_bytes + 8 * small_bytes)))

    cost = pl.CostEstimate(
        flops=int(8 * n * c + 16 * n),
        transcendentals=int(n * c + 3 * n),
        bytes_accessed=int(n * c * itemsize + 2 * n * 4),
    )

    per_sample = pl.pallas_call(
        kernel,
        out_shape=jax.ShapeDtypeStruct((1, n), jnp.float32),
        grid=grid,
        in_specs=[
            pl.BlockSpec((c, block_n), lambda i: (0, i)),      # logits (class-major)
            pl.BlockSpec((1, block_n), lambda i: (0, i)),      # targets
        ],
        out_specs=pl.BlockSpec((1, block_n), lambda i: (0, i)),
        compiler_params=pltpu.CompilerParams(
            dimension_semantics=("parallel",),                 # blocks independent
            vmem_limit_bytes=vmem_limit,
        ),
        cost_estimate=cost,
    )(xT, tgt)

    per_sample = per_sample[0]                                 # (N,)
    if reduction == "mean":
        return jnp.mean(per_sample)
    if reduction == "sum":
        return jnp.sum(per_sample)
    return per_sample                                          # 'none'


# --------------------------------- reference ---------------------------------
def focal_loss_ref(logits, targets, *, alpha=1.0, gamma=2.0, reduction="mean"):
    logits = logits.astype(jnp.float32)
    logp = jax.nn.log_softmax(logits, axis=-1)
    ce = -jnp.take_along_axis(logp, targets[:, None].astype(jnp.int32), axis=-1)[:, 0]
    pt = jnp.exp(-ce)
    fl = alpha * (1.0 - pt) ** gamma * ce
    if reduction == "mean":
        return jnp.mean(fl)
    if reduction == "sum":
        return jnp.sum(fl)
    return fl


# ----------------------------------- main ------------------------------------
if __name__ == "__main__":
    N, C = 512, 10                     # small classification batch
    key = jax.random.PRNGKey(0)
    kx, kt = jax.random.split(key)
    logits = jax.random.normal(kx, (N, C), dtype=jnp.float32) * 2.0
    targets = jax.random.randint(kt, (N,), 0, C, dtype=jnp.int32)

    loss = focal_loss(logits, targets, alpha=1.0, gamma=2.0, reduction="mean",
                      block_n=128)     # -> 4 grid steps at this demo size
    loss = jax.block_until_ready(loss)

    ref = focal_loss_ref(logits, targets, alpha=1.0, gamma=2.0, reduction="mean")
    ref = jax.block_until_ready(ref)

    np.testing.assert_allclose(np.asarray(loss), np.asarray(ref),
                               rtol=1e-5, atol=1e-5)
    print("KERNEL_OK")
</pallas_src>

<mosaic_0001>
module attributes {stable_mosaic.version = 11 : i64} {
  func.func @_focal_loss_kernel(%arg0: i32, %arg1: memref<10x128xf32, #tpu.memory_space<vmem>>, %arg2: memref<1x128xi32, #tpu.memory_space<vmem>>, %arg3: memref<1x128xf32, #tpu.memory_space<vmem>>) attributes {dimension_semantics = [#tpu.dimension_semantics<parallel>], iteration_bounds = array<i64: 4>, scalar_prefetch = 0 : i64, scratch_operands = 0 : i64, tpu.core_type = #tpu.core_type<tc>, window_params = [{transform_indices = @transform_0, window_bounds = array<i64: 10, 128>}, {transform_indices = @transform_1, window_bounds = array<i64: 1, 128>}, {transform_indices = @transform_2, window_bounds = array<i64: 1, 128>}]} {
    %c0 = arith.constant 0 : index
    %c0_0 = arith.constant 0 : index
    %0 = vector.load %arg1[%c0, %c0_0] : memref<10x128xf32, #tpu.memory_space<vmem>>, vector<10x128xf32>
    %c0_1 = arith.constant 0 : index
    %c0_2 = arith.constant 0 : index
    %1 = vector.load %arg2[%c0_1, %c0_2] : memref<1x128xi32, #tpu.memory_space<vmem>>, vector<1x128xi32>
    %cst = arith.constant dense<0xFF800000> : vector<128xf32>
    %2 = vector.multi_reduction <maximumf>, %0, %cst [0] : vector<10x128xf32> to vector<128xf32>
    %3 = vector.shape_cast %2 : vector<128xf32> to vector<1x128xf32>
    %4 = vector.broadcast %3 : vector<1x128xf32> to vector<10x128xf32>
    %5 = arith.subf %0, %4 : vector<10x128xf32>
    %6 = math.exp %5 : vector<10x128xf32>
    %cst_3 = arith.constant dense<0.000000e+00> : vector<128xf32>
    %7 = vector.multi_reduction <add>, %6, %cst_3 [0] : vector<10x128xf32> to vector<128xf32>
    %8 = vector.shape_cast %7 : vector<128xf32> to vector<1x128xf32>
    %9 = tpu.iota {dimensions = array<i32: 0>} : vector<10x128xi32>
    %10 = vector.broadcast %1 : vector<1x128xi32> to vector<10x128xi32>
    %11 = arith.cmpi eq, %9, %10 : vector<10x128xi32>
    %cst_4 = arith.constant 0.000000e+00 : f32
    %12 = vector.broadcast %cst_4 : f32 to vector<10x128xf32>
    %13 = arith.select %11, %0, %12 : vector<10x128xi1>, vector<10x128xf32>
    %cst_5 = arith.constant dense<0.000000e+00> : vector<128xf32>
    %14 = vector.multi_reduction <add>, %13, %cst_5 [0] : vector<10x128xf32> to vector<128xf32>
    %15 = vector.shape_cast %14 : vector<128xf32> to vector<1x128xf32>
    %16 = arith.subf %3, %15 : vector<1x128xf32>
    %17 = math.log %8 : vector<1x128xf32>
    %18 = arith.addf %16, %17 : vector<1x128xf32>
    %cst_6 = arith.constant 0.000000e+00 : f32
    %19 = vector.broadcast %cst_6 : f32 to vector<1x128xf32>
    %20 = arith.subf %19, %18 : vector<1x128xf32>
    %21 = math.exp %20 : vector<1x128xf32>
    %cst_7 = arith.constant 1.000000e+00 : f32
    %22 = vector.broadcast %cst_7 : f32 to vector<1x128xf32>
    %23 = arith.subf %22, %21 : vector<1x128xf32>
    %cst_8 = arith.constant 0.000000e+00 : f32
    %24 = vector.broadcast %cst_8 : f32 to vector<1x128xf32>
    %25 = arith.maximumf %23, %24 : vector<1x128xf32>
    %cst_9 = arith.constant 1.000000e+00 : f32
    %26 = vector.broadcast %cst_9 : f32 to vector<1x128xf32>
    %27 = arith.mulf %26, %25 : vector<1x128xf32>
    %28 = arith.mulf %27, %25 : vector<1x128xf32>
    %cst_10 = arith.constant 1.000000e+00 : f32
    %29 = vector.broadcast %cst_10 : f32 to vector<1x128xf32>
    %30 = arith.mulf %29, %28 : vector<1x128xf32>
    %31 = arith.mulf %30, %18 : vector<1x128xf32>
    %c0_11 = arith.constant 0 : index
    %c0_12 = arith.constant 0 : index
    %32 = vector.load %arg3[%c0_11, %c0_12] : memref<1x128xf32, #tpu.memory_space<vmem>>, vector<1x128xf32>
    tpu.vector_store %arg3[%c0_11, %c0_12], %31 {strides = array<i32>} : memref<1x128xf32, #tpu.memory_space<vmem>>, vector<1x128xf32>,
    return
  }
  func.func @transform_0(%arg0: i32) -> (i32, i32) {
    %c0_i32 = arith.constant 0 : i32
    %c0_i32_0 = arith.constant 0 : i32
    return %c0_i32, %arg0 : i32, i32
  }
  func.func @transform_1(%arg0: i32) -> (i32, i32) {
    %c0_i32 = arith.constant 0 : i32
    %c0_i32_0 = arith.constant 0 : i32
    return %c0_i32, %arg0 : i32, i32
  }
  func.func @transform_2(%arg0: i32) -> (i32, i32) {
    %c0_i32 = arith.constant 0 : i32
    %c0_i32_0 = arith.constant 0 : i32
    return %c0_i32, %arg0 : i32, i32
  }
}

</mosaic_0001>

<llo_original>
// kernel: tpu_custom_call.1
$region0: #{tpu_custom_call.1}
  #allocation0 [shape = 'u32[]', space=smem, size = 0x4, offset = 0x4, fixed_abs, tag = 'smem constant byte address 0x4 - core index']
  #allocation1 [shape = 'u32[144,128]{1,0:T(1,128)}', space=vmem, size = 0x12000, scoped, tag = 'internal scratch']
  %s0 = inlined_call_operand.hbm [shape: f32[10,512], index: 0, kind: input, shape index: {}]
  %s1 = inlined_call_operand.hbm [shape: s32[1,512], index: 1, kind: input, shape index: {}]
  %s2 = inlined_call_operand.hbm [shape: f32[1,512], index: 2, kind: output, shape index: {}]
  %s3 = sld [smem:[#allocation0]]
  $region49: #{tpu_custom_call.1} parent=0
    _
  %s5 = ssub.s32 1, %s3
  %s6 = scalar_select 0, %s5, %s3
  $region1: #{tpu_custom_call.1} parent=0
    #allocation2 [shape = 'u8[16384]{0}', space=vmem, size = 0x4000, scoped, tag = 'input window, operand 0']
    #allocation3 [shape = 's32[2]{0}', space=sflag, size = 0x8, scoped, tag = 'scoped memory for tpu_custom_call.1']
    #allocation4 [shape = 's32[2]{0}', space=sflag, size = 0x8, scoped, tag = 'scoped memory for tpu_custom_call.1']
    #allocation5 [shape = 'u8[1024]{0}', space=vmem, size = 0x400, scoped, tag = 'input window, operand 1']
    #allocation6 [shape = 's32[2]{0}', space=sflag, size = 0x8, scoped, tag = 'scoped memory for tpu_custom_call.1']
    #allocation7 [shape = 'u8[1024]{0}', space=vmem, size = 0x400, scoped, tag = 'output window, operand 0']
    %7 = vsyncpa [#allocation3], 0
    %s8 = scalar_lea.sflag [#allocation3], 1
    %9 = vsyncpa %s8, 0
    %10 = vsyncpa [#allocation6], 0
    %s11 = scalar_lea.sflag [#allocation6], 1
    %12 = vsyncpa %s11, 0
    %13 = vsyncpa [#allocation4], 0
    %s14 = scalar_lea.sflag [#allocation4], 1
    %15 = vsyncpa %s14, 0
    loop: start=0, step=1, limit=6
    $region2: #{tpu_custom_call.1} parent=1 // loop_pre_header
      _
    $region3: #{tpu_custom_call.1} parent=1 // loop_header
      %s17 = sphi 0, %s21
      %p18 = scmp.ge.s32.totalorder %s17, 6
      %s27 = sphi 0, %s29
      %s30 = sphi 0, %s27
      %s31 = sphi 0, %s30
      %s47 = sphi 0, %s31
      %s53 = sphi 0, %s55
      %s56 = sphi 0, %s53
      %s57 = sphi 0, %s56
      %s73 = sphi 0, %s57
      %s79 = sphi 0, %s81
      %s82 = sphi 0, %s79
      %s83 = sphi 0, %s82
      %s99 = sphi 0, %s83
    $region4: #{tpu_custom_call.1} parent=1 // loop_header_branch
      %20 = sbr.rel (%p18) target = $region8
    $region5: #{tpu_custom_call.1} parent=1 // loop_body
      %s22 = ssub.s32 %s17, 1
      %s23 = ssub.s32 %s17, 2
      %s24 = sadd.s32 %s17, 1
      %s25 = ssub.s32 %s17, %s24
      %p26 = scmp.eq.s32.totalorder %s25, 0
      %s28 = sadd.s32 %s27, 1
      %s29 = scalar_select %p26, %s27, %s28
      %p32 = pneg %p26
      %p33 = scmp.eq.s32.totalorder %s17, 3
      %p34 = por %p32, %p33
      %p35 = scmp.ne.s32.totalorder %s27, %s30
      %p36 = scmp.eq.s32.totalorder %s17, 0
      %p37 = por %p35, %p36
      %p38 = scmp.ne.s32.totalorder %s27, %s30
      %p39 = scmp.eq.s32.totalorder %s22, 3
      %p40 = por %p38, %p39
      %p41 = scmp.ne.s32.totalorder %s30, %s31
      %p42 = scmp.eq.s32.totalorder %s22, 0
      %p43 = por %p41, %p42
      %p44 = scmp.ne.s32.totalorder %s30, %s31
      %p45 = scmp.eq.s32.totalorder %s23, 3
      %p46 = por %p44, %p45
      %p48 = scmp.ne.s32.totalorder %s31, %s47
      %p49 = scmp.eq.s32.totalorder %s23, 0
      %p50 = por %p48, %p49
      %s51 = ssub.s32 %s17, %s24
      %p52 = scmp.eq.s32.totalorder %s51, 0
      %s54 = sadd.s32 %s53, 1
      %s55 = scalar_select %p52, %s53, %s54
      %p58 = pneg %p52
      %p59 = scmp.eq.s32.totalorder %s17, 3
      %p60 = por %p58, %p59
      %p61 = scmp.ne.s32.totalorder %s53, %s56
      %p62 = scmp.eq.s32.totalorder %s17, 0
      %p63 = por %p61, %p62
      %p64 = scmp.ne.s32.totalorder %s53, %s56
      %p65 = scmp.eq.s32.totalorder %s22, 3
      %p66 = por %p64, %p65
      %p67 = scmp.ne.s32.totalorder %s56, %s57
      %p68 = scmp.eq.s32.totalorder %s22, 0
      %p69 = por %p67, %p68
      %p70 = scmp.ne.s32.totalorder %s56, %s57
      %p71 = scmp.eq.s32.totalorder %s23, 3
      %p72 = por %p70, %p71
      %p74 = scmp.ne.s32.totalorder %s57, %s73
      %p75 = scmp.eq.s32.totalorder %s23, 0
      %p76 = por %p74, %p75
      %s77 = ssub.s32 %s17, %s24
      %p78 = scmp.eq.s32.totalorder %s77, 0
      %s80 = sadd.s32 %s79, 1
      %s81 = scalar_select %p78, %s79, %s80
      %p84 = pneg %p78
      %p85 = scmp.eq.s32.totalorder %s17, 3
      %p86 = por %p84, %p85
      %p87 = scmp.ne.s32.totalorder %s79, %s82
      %p88 = scmp.eq.s32.totalorder %s17, 0
      %p89 = por %p87, %p88
      %p90 = scmp.ne.s32.totalorder %s79, %s82
      %p91 = scmp.eq.s32.totalorder %s22, 3
      %p92 = por %p90, %p91
      %p93 = scmp.ne.s32.totalorder %s82, %s83
      %p94 = scmp.eq.s32.totalorder %s22, 0
      %p95 = por %p93, %p94
      %p96 = scmp.ne.s32.totalorder %s82, %s83
      %p97 = scmp.eq.s32.totalorder %s23, 3
      %p98 = por %p96, %p97
      %p100 = scmp.ne.s32.totalorder %s83, %s99
      %p101 = scmp.eq.s32.totalorder %s23, 0
      %p102 = por %p100, %p101
      %p103 = scmp.le.s32.totalorder 1, %s17
      %p104 = scmp.lt.s32.totalorder %s17, 5
      %p105 = pnand %p103, %p104
      %p106 = pneg %p105
      // Predicated region
      $region9: #{tpu_custom_call.1} parent=5 // pred_check
        _
      $region10: #{tpu_custom_call.1} parent=5 // pred_check_branch
        %108 = sbr.rel (%p105) target = $region12
      $region11: #{tpu_custom_call.1} parent=5 // pred_region
        %s109 = ssub.s32 %s17, 1
      $region12: #{tpu_custom_call.1} parent=5 // pred_fallthru
        _
      %p110 = scmp.lt.s32.totalorder %s17, 4
      // Predicated region
      $region13: #{tpu_custom_call.1} parent=5 // pred_check
        %p111 = pneg %p110
      $region14: #{tpu_custom_call.1} parent=5 // pred_check_branch
        %113 = sbr.rel (%p111) target = $region16
      $region15: #{tpu_custom_call.1} parent=5 // pred_region
        // Predicated region
        $region17: #{tpu_custom_call.1} parent=15 // pred_check
          %p114 = pneg %p37
        $region18: #{tpu_custom_call.1} parent=15 // pred_check_branch
          %116 = sbr.rel (%p114) target = $region20
        $region19: #{tpu_custom_call.1} parent=15 // pred_region
          %s117 = sand.u32 %s27, 1
          %s118 = scalar_lea.sflag [#allocation3], %s117
          %s119 = sand.u32 %s27, 1
          %s120 = smul.addr %s119, 16
          %s121 = scalar_lea.vmem [#allocation2], %s120
          %s123 = ssub.s32 256, 256
          %124 = vsyncadd %s118, %s123
          %s125 = smul.addr %s17, 128
          %s126 = scalar_lea.hbm %s0, %s125
          %s127 = sshll.u32 %s121, 4
          %s128 = int_to_ptr.vmem [resolvable:$true] %s127
          %133 = dma.hbm_to_vmem [thread:$0]  %s126, 256, %s128, %s118, 512, 128, 8
        $region20: #{tpu_custom_call.1} parent=15 // pred_fallthru
          _
        // Predicated region
        $region21: #{tpu_custom_call.1} parent=15 // pred_check
          %p134 = pneg %p63
        $region22: #{tpu_custom_call.1} parent=15 // pred_check_branch
          %136 = sbr.rel (%p134) target = $region24
        $region23: #{tpu_custom_call.1} parent=15 // pred_region
          %s137 = sand.u32 %s53, 1
          %s138 = scalar_lea.sflag [#allocation6], %s137
          %s139 = sand.u32 %s53, 1
          %s140 = scalar_lea.vmem [#allocation5], %s139
          %s142 = ssub.s32 16, 16
          %143 = vsyncadd %s138, %s142
          %s144 = smul.addr %s17, 16
          %s145 = scalar_lea.hbm %s1, %s144
          %s147 = sshll.u32 %s140, 4
          %s148 = int_to_ptr.vmem [resolvable:$true] %s147
          %150 = dma.hbm_to_vmem [thread:$0]  %s145, 16, %s148, %s138
        $region24: #{tpu_custom_call.1} parent=15 // pred_fallthru
          _
      $region16: #{tpu_custom_call.1} parent=5 // pred_fallthru
        _
      %p151 = scmp.le.s32.totalorder 1, %s17
      %p152 = scmp.lt.s32.totalorder %s17, 5
      %p153 = pnand %p151, %p152
      %p154 = pneg %p153
      // Predicated region
      $region25: #{tpu_custom_call.1} parent=5 // pred_check
        _
      $region26: #{tpu_custom_call.1} parent=5 // pred_check_branch
        %156 = sbr.rel (%p153) target = $region28
      $region27: #{tpu_custom_call.1} parent=5 // pred_region
        %s157 = ssub.s32 %s17, 1
        %s158 = sand.u32 %s30, 1
        %s159 = scalar_lea.sflag [#allocation3], %s158
        %s160 = sand.u32 %s30, 1
        %s161 = smul.addr %s160, 16
        %s162 = scalar_lea.vmem [#allocation2], %s161
        // Predicated region
        $region29: #{tpu_custom_call.1} parent=27 // pred_check
          %p163 = pneg %p43
        $region30: #{tpu_custom_call.1} parent=27 // pred_check_branch
          %165 = sbr.rel (%p163) target = $region32
        $region31: #{tpu_custom_call.1} parent=27 // pred_region
          %166 = dma.done %s159, 256
        $region32: #{tpu_custom_call.1} parent=27 // pred_fallthru
          _
        %s167 = sand.u32 %s56, 1
        %s168 = scalar_lea.sflag [#allocation6], %s167
        %s169 = sand.u32 %s56, 1
        %s170 = scalar_lea.vmem [#allocation5], %s169
        // Predicated region
        $region33: #{tpu_custom_call.1} parent=27 // pred_check
          %p171 = pneg %p69
        $region34: #{tpu_custom_call.1} parent=27 // pred_check_branch
          %173 = sbr.rel (%p171) target = $region36
        $region35: #{tpu_custom_call.1} parent=27 // pred_region
          %174 = dma.done %s168, 16
        $region36: #{tpu_custom_call.1} parent=27 // pred_fallthru
          _
        %s175 = sand.u32 %s30, 1
        %s176 = scalar_lea.sflag [#allocation3], %s175
        %s177 = sand.u32 %s30, 1
        %s178 = smul.addr %s177, 16
        %s179 = scalar_lea.vmem [#allocation2], %s178
        %p180 = pneg %p43
        %p181 = pneg %p40
        %s182 = sand.u32 %s56, 1
        %s183 = scalar_lea.sflag [#allocation6], %s182
        %s184 = sand.u32 %s56, 1
        %s185 = scalar_lea.vmem [#allocation5], %s184
        %p186 = pneg %p69
        %p187 = pneg %p66
        %p188 = pneg %p95
        %p189 = pneg %p92
        %s190 = sand.u32 %s82, 1
        %s191 = scalar_lea.sflag [#allocation4], %s190
        %s192 = sand.u32 %s82, 1
        %s193 = scalar_lea.vmem [#allocation7], %s192
        %v194 = vld [vmem:[%s162] sm:$0xff]
        %v195 = vld [vmem:[%s162 + $0x8] sm:$0x3]
        %v196 = vld [vmem:[%s170] sm:$0x1]
        %vm197 = vcmask 1041408
        %v198 = vsel %vm197, %v195, -inf
        %v199 = vmax.f32 %v194, %v198
        %v200 = vrot.slane %v199, 4
        %v201 = vmax.f32 %v199, %v200
        %v202 = vrot.slane %v201, 2
        %v203 = vmax.f32 %v201, %v202
        %v204 = vrot.slane %v203, 1
        %v205 = vmax.f32 %v203, %v204
        %v206 = vsub.f32 %v194, %v205
        %v207 = vsub.f32 %v195, %v205
        %v208 = vmul.f32 %v206, 1.442695
        %v209 = vpow.pop %v208
        %v210 = vmul.f32 %v207, 1.442695
        %v211 = vpow.pop %v210
        %v212 = vsel %vm197, %v211, 0.0
        %v213 = vadd.f32 %v209, %v212
        %v214 = vrot.slane %v213, 4
        %v215 = vadd.f32 %v213, %v214
        %v216 = vrot.slane %v215, 2
        %v217 = vadd.f32 %v215, %v216
        %v218 = vrot.slane %v217, 1
        %v219 = vadd.f32 %v217, %v218
        %v220 = vlaneseq
        %v221 = vshrl.u32 %v220, 7
        %v222 = vadd.s32 %v221, 8
        %v223 = vlaneseq
        %v224 = vshrl.u32 %v223, 7
        %v225 = vsub.s32 0, %v224
        %v226 = vrot.slane %v196, %v225
        %vm227 = vcmp.eq.s32.totalorder %v221, %v226
        %vm228 = vcmp.eq.s32.totalorder %v222, %v226
        %v229 = vsel %vm227, %v194, 0.0
        %v230 = vsel %vm228, %v195, 0.0
        %v231 = vsel %vm197, %v230, 0.0
        %v232 = vadd.f32 %v229, %v231
        %v233 = vrot.slane %v232, 4
        %v234 = vadd.f32 %v232, %v233
        %v235 = vrot.slane %v234, 2
        %v236 = vadd.f32 %v234, %v235
        %v237 = vrot.slane %v236, 1
        %v238 = vadd.f32 %v236, %v237
        %v239 = vsub.f32 %v205, %v238
        %v240 = vlog2.pop %v219
        %v241 = vmul.f32 %v240, 0.6931472
        %v242 = vadd.f32 %v239, %v241
        %v243 = vsub.f32 0.0, %v242
        %v244 = vmul.f32 %v243, 1.442695
        %v245 = vpow.pop %v244
        %v246 = vsub.f32 1.0, %v245
        %v247 = vmax.f32 %v246, 0.0
        %v248 = vmul.f32 %v247, %v247
        %v249 = vmul.f32 %v248, %v242
        %250 = vst [vmem:[%s193] sm:$0x1] %v249
        %s251 = sand.u32 %s82, 1
        %s252 = scalar_lea.sflag [#allocation4], %s251
        %s253 = sand.u32 %s82, 1
        %s254 = scalar_lea.vmem [#allocation7], %s253
        // Predicated region
        $region37: #{tpu_custom_call.1} parent=27 // pred_check
          %p255 = pneg %p92
        $region38: #{tpu_custom_call.1} parent=27 // pred_check_branch
          %257 = sbr.rel (%p255) target = $region40
        $region39: #{tpu_custom_call.1} parent=27 // pred_region
          %s259 = ssub.s32 16, 16
          %260 = vsyncadd %s252, %s259
          %s261 = smul.addr %s22, 16
          %s262 = scalar_lea.hbm %s2, %s261
          %s264 = sshll.u32 %s254, 4
          %s265 = int_to_ptr.vmem [resolvable:$true] %s264
          %267 = dma.vmem_to_hbm [thread:$0]  %s265, 16, %s262, %s252
        $region40: #{tpu_custom_call.1} parent=27 // pred_fallthru
          _
      $region28: #{tpu_custom_call.1} parent=5 // pred_fallthru
        _
      %p268 = scmp.le.s32.totalorder 2, %s17
      // Predicated region
      $region41: #{tpu_custom_call.1} parent=5 // pred_check
        %p269 = pneg %p268
      $region42: #{tpu_custom_call.1} parent=5 // pred_check_branch
        %271 = sbr.rel (%p269) target = $region44
      $region43: #{tpu_custom_call.1} parent=5 // pred_region
        %s272 = ssub.s32 %s17, 2
        // Predicated region
        $region45: #{tpu_custom_call.1} parent=43 // pred_check
          %p273 = pneg %p98
        $region46: #{tpu_custom_call.1} parent=43 // pred_check_branch
          %275 = sbr.rel (%p273) target = $region48
        $region47: #{tpu_custom_call.1} parent=43 // pred_region
          %s276 = sand.u32 %s83, 1
          %s277 = scalar_lea.sflag [#allocation4], %s276
          %s278 = sand.u32 %s83, 1
          %s279 = scalar_lea.vmem [#allocation7], %s278
          %280 = dma.done %s277, 16
        $region48: #{tpu_custom_call.1} parent=43 // pred_fallthru
          _
      $region44: #{tpu_custom_call.1} parent=5 // pred_fallthru
        _
    $region6: #{tpu_custom_call.1} parent=1 // loop_footer
      %s21 = sadd.s32 1, %s17
    $region7: #{tpu_custom_call.1} parent=1 // loop_footer_branch
      %16 = sbr.rel target = $region3
    $region8: #{tpu_custom_call.1} parent=1 // loop_exit
      _
    %281 = vsyncpa [#allocation3], 1
    %s282 = scalar_lea.sflag [#allocation3], 1
    %283 = vsyncpa %s282, 1
    %284 = vsyncpa [#allocation6], 1
    %s285 = scalar_lea.sflag [#allocation6], 1
    %286 = vsyncpa %s285, 1
    %287 = vsyncpa [#allocation4], 1
    %s288 = scalar_lea.sflag [#allocation4], 1
    %289 = vsyncpa %s288, 1

</llo_original>
